<compile_context>
chip_gen: v5e
topology: v5e:2x2
jax: 0.10.0
libtpu: 0.0.40
codegen_flags: <defaults>
</compile_context>

<pallas_src>
import jax
import jax.numpy as jnp
from jax.experimental import pallas as pl
from jax.experimental.pallas import tpu as pltpu


def _round_up(x, m):
    return ((x + m - 1) // m) * m


def _grouped_mlp_kernel(tile_cat_ref, x_ref, w1_ref, b1_ref, w2_ref, b2_ref,
                        o_ref):
    # One grid step = one tile of `tile_m` rows, all of one category.
    #   x_ref : (tile_m, d_in_p)
    #   w1_ref: (1, d_in_p, mid_p)    W1[tile_cat[t]]
    #   b1_ref: (1, 1, mid_p)         b1[tile_cat[t]]
    #   w2_ref: (1, mid_p, d_out_p)   W2[tile_cat[t]]
    #   b2_ref: (1, 1, d_out_p)       b2[tile_cat[t]]
    #   o_ref : (tile_m, d_out_p)
    x = x_ref[...]
    h = jnp.dot(x, w1_ref[0], preferred_element_type=jnp.float32) + b1_ref[0]
    h = jnp.maximum(h, 0.0)                                   # ReLU (f32)
    out = jnp.dot(h.astype(w2_ref.dtype), w2_ref[0],
                  preferred_element_type=jnp.float32) + b2_ref[0]
    o_ref[...] = out.astype(o_ref.dtype)


def category_specific_sequence_mlp(x, cat_ids, params, target_seq_length,
                                   action_dim, *, tile_m=128,
                                   compute_dtype=None):
    """x: (B, seq_length, hidden_dim); cat_ids: (B,) int32 in [0, G)."""
    W1, b1, W2, b2 = params["W1"], params["b1"], params["W2"], params["b2"]
    B, S, H = x.shape
    G = W1.shape[0]
    d_in = S * H
    mid = W1.shape[-1]
    d_out = W2.shape[-1]
    assert d_out == target_seq_length * action_dim
    out_dtype = x.dtype

    # Optional low-precision weights/activations (f32 accumulation preserved).
    if compute_dtype is not None:
        x = x.astype(compute_dtype)
        W1 = W1.astype(compute_dtype)
        b1 = b1.astype(compute_dtype)
        W2 = W2.astype(compute_dtype)
        b2 = b2.astype(compute_dtype)

    # ---- pad feature dims to lane (128) multiples: lane-dense tiles --------
    # (On v6e/v7x, rounding mid/d_out to 256 further improves MXU occupancy.)
    d_in_p = _round_up(d_in, 128)
    mid_p = _round_up(mid, 128)
    d_out_p = _round_up(d_out, 128)

    x_flat = jnp.pad(x.reshape(B, d_in), ((0, 0), (0, d_in_p - d_in)))
    W1p = jnp.pad(W1, ((0, 0), (0, d_in_p - d_in), (0, mid_p - mid)))
    b1p = jnp.pad(b1, ((0, 0), (0, mid_p - mid))).reshape(G, 1, mid_p)
    W2p = jnp.pad(W2, ((0, 0), (0, mid_p - mid), (0, d_out_p - d_out)))
    b2p = jnp.pad(b2, ((0, 0), (0, d_out_p - d_out))).reshape(G, 1, d_out_p)

    # ---- group rows by category into tile_m-row tiles ----------------------
    tm = tile_m
    num_tiles = -(-B // tm) + G          # static upper bound on row tiles
    n_rows_p = num_tiles * tm

    order = jnp.argsort(cat_ids)                             # (B,)
    cat_sorted = cat_ids[order]
    counts = jnp.bincount(cat_ids, length=G)                 # (G,)
    tiles_per_group = (counts + tm - 1) // tm                # (G,)
    tile_ends = jnp.cumsum(tiles_per_group)                  # (G,)
    tile_start = tile_ends - tiles_per_group                 # (G,)
    row_start_padded = tile_start * tm                       # (G,)
    sorted_start = jnp.cumsum(counts) - counts               # (G,)
    pos_in_group = jnp.arange(B) - sorted_start[cat_sorted]
    padded_row = (row_start_padded[cat_sorted] + pos_in_group).astype(jnp.int32)

    # tile -> category (inactive trailing tiles clamped; their rows are zero
    # and their outputs are never gathered back).
    tile_cat = jnp.searchsorted(tile_ends, jnp.arange(num_tiles), side="right")
    tile_cat = jnp.minimum(tile_cat, G - 1).astype(jnp.int32)

    x_grouped = jnp.zeros((n_rows_p, d_in_p), x_flat.dtype)
    x_grouped = x_grouped.at[padded_row].set(x_flat[order])

    # ---- VMEM budget / cost estimate ---------------------------------------
    wbytes = jnp.dtype(W1p.dtype).itemsize
    xbytes = jnp.dtype(x_grouped.dtype).itemsize
    obytes = jnp.dtype(out_dtype).itemsize
    weight_block_bytes = (d_in_p * mid_p + mid_p * d_out_p
                          + mid_p + d_out_p) * wbytes
    io_block_bytes = tm * d_in_p * xbytes + tm * d_out_p * obytes
    vmem_limit = int(min(max(2 * (weight_block_bytes + io_block_bytes)
                             + (4 << 20), 32 << 20), 64 << 20))
    # TODO(synk): add K/N grid axes with a VMEM f32 accumulator scratch
    # (pl.when init/finalize) when d_in/mid/d_out grow beyond the v7x 64 MiB
    # VMEM budget; current shapes fit comfortably with double-buffering.

    cost = pl.CostEstimate(
        flops=2 * n_rows_p * (d_in_p * mid_p + mid_p * d_out_p),
        transcendentals=0,
        bytes_accessed=int(n_rows_p * (d_in_p * xbytes + d_out_p * obytes)
                           + G * weight_block_bytes),
    )

    out_grouped = pl.pallas_call(
        _grouped_mlp_kernel,
        out_shape=jax.ShapeDtypeStruct((n_rows_p, d_out_p), out_dtype),
        grid_spec=pltpu.PrefetchScalarGridSpec(
            num_scalar_prefetch=1,
            grid=(num_tiles,),
            in_specs=[
                pl.BlockSpec((tm, d_in_p), lambda t, tc: (t, 0)),           # x
                pl.BlockSpec((1, d_in_p, mid_p),
                             lambda t, tc: (tc[t], 0, 0)),                  # W1
                pl.BlockSpec((1, 1, mid_p), lambda t, tc: (tc[t], 0, 0)),   # b1
                pl.BlockSpec((1, mid_p, d_out_p),
                             lambda t, tc: (tc[t], 0, 0)),                  # W2
                pl.BlockSpec((1, 1, d_out_p), lambda t, tc: (tc[t], 0, 0)), # b2
            ],
            out_specs=pl.BlockSpec((tm, d_out_p), lambda t, tc: (t, 0)),
        ),
        compiler_params=pltpu.CompilerParams(
            dimension_semantics=("parallel",),
            vmem_limit_bytes=vmem_limit,
        ),
        cost_estimate=cost,
    )(tile_cat, x_grouped, W1p, b1p, W2p, b2p)

    # ---- gather rows back to the original order, drop feature padding ------
    out_sorted = out_grouped[padded_row][:, :d_out]          # sorted row order
    out_flat = jnp.zeros((B, d_out), out_dtype).at[order].set(out_sorted)
    return out_flat.reshape(B, target_seq_length, action_dim)


def init_params(key, num_categories, seq_length, hidden_dim,
                target_seq_length, action_dim, mid_dim, dtype=jnp.float32):
    d_in = seq_length * hidden_dim
    d_out = target_seq_length * action_dim
    k1, k2 = jax.random.split(key)
    return {
        "W1": (0.02 * jax.random.normal(k1, (num_categories, d_in, mid_dim))
               ).astype(dtype),
        "b1": jnp.zeros((num_categories, mid_dim), dtype),
        "W2": (0.02 * jax.random.normal(k2, (num_categories, mid_dim, d_out))
               ).astype(dtype),
        "b2": jnp.zeros((num_categories, d_out), dtype),
    }


def _reference(x, cat_ids, params, target_seq_length, action_dim):
    B = x.shape[0]
    x_flat = x.reshape(B, -1)
    W1 = params["W1"][cat_ids]
    b1 = params["b1"][cat_ids]
    W2 = params["W2"][cat_ids]
    b2 = params["b2"][cat_ids]
    h = jax.nn.relu(jnp.einsum("bi,bio->bo", x_flat, W1) + b1)
    out = jnp.einsum("bm,bmo->bo", h, W2) + b2
    return out.reshape(B, target_seq_length, action_dim)


if __name__ == "__main__":
    # Small, module-consistent shapes.
    num_categories = 3
    seq_length = 8
    hidden_dim = 32
    target_seq_length = 16
    action_dim = 8
    mid_dim = 128
    B = 2

    key = jax.random.PRNGKey(0)
    kx, kc, kp = jax.random.split(key, 3)

    x = jax.random.normal(kx, (B, seq_length, hidden_dim), dtype=jnp.float32)
    cat_ids = jax.random.randint(kc, (B,), 0, num_categories, dtype=jnp.int32)
    params = init_params(kp, num_categories, seq_length, hidden_dim,
                         target_seq_length, action_dim, mid_dim)

    ref = _reference(x, cat_ids, params, target_seq_length, action_dim)

    # f32 path: tight correctness check.
    out = category_specific_sequence_mlp(x, cat_ids, params,
                                         target_seq_length, action_dim)
    out = jax.block_until_ready(out)
    assert out.shape == (B, target_seq_length, action_dim)
    assert jnp.allclose(out, ref, atol=1e-5, rtol=1e-5), "f32 mismatch vs reference"

    # bf16 weights/activations (f32 accumulation): halves HBM traffic for the
    # dominant weight arrays; loose tolerance vs the f32 reference.
    out_bf16 = category_specific_sequence_mlp(
        x, cat_ids, params, target_seq_length, action_dim,
        compute_dtype=jnp.bfloat16)
    out_bf16 = jax.block_until_ready(out_bf16)
    assert jnp.allclose(out_bf16, ref, atol=2e-2, rtol=2e-2), \
        "bf16 mismatch vs reference"

    print("KERNEL_OK")
</pallas_src>

<mosaic_0001>
module attributes {stable_mosaic.version = 11 : i64} {
  func.func @_grouped_mlp_kernel(%arg0: i32, %arg1: memref<4xi32, #tpu.memory_space<smem>>, %arg2: memref<128x256xf32, #tpu.memory_space<vmem>>, %arg3: memref<1x256x128xf32, #tpu.memory_space<vmem>>, %arg4: memref<1x1x128xf32, #tpu.memory_space<vmem>>, %arg5: memref<1x128x128xf32, #tpu.memory_space<vmem>>, %arg6: memref<1x1x128xf32, #tpu.memory_space<vmem>>, %arg7: memref<128x128xf32, #tpu.memory_space<vmem>>) attributes {dimension_semantics = [#tpu.dimension_semantics<parallel>], iteration_bounds = array<i64: 4>, scalar_prefetch = 1 : i64, scratch_operands = 0 : i64, tpu.core_type = #tpu.core_type<tc>, window_params = [{transform_indices = @transform_0, window_bounds = array<i64: 128, 256>}, {transform_indices = @transform_1, window_bounds = array<i64: 1, 256, 128>}, {transform_indices = @transform_2, window_bounds = array<i64: 1, 1, 128>}, {transform_indices = @transform_3, window_bounds = array<i64: 1, 128, 128>}, {transform_indices = @transform_4, window_bounds = array<i64: 1, 1, 128>}, {transform_indices = @transform_5, window_bounds = array<i64: 128, 128>}]} {
    %c0 = arith.constant 0 : index
    %c0_0 = arith.constant 0 : index
    %0 = vector.load %arg2[%c0, %c0_0] : memref<128x256xf32, #tpu.memory_space<vmem>>, vector<128x256xf32>
    %c0_1 = arith.constant 0 : index
    %c0_2 = arith.constant 0 : index
    %c0_3 = arith.constant 0 : index
    %1 = vector.load %arg3[%c0_1, %c0_2, %c0_3] : memref<1x256x128xf32, #tpu.memory_space<vmem>>, vector<1x256x128xf32>
    %2 = vector.shape_cast %1 : vector<1x256x128xf32> to vector<256x128xf32>
    %cst = arith.constant dense<0.000000e+00> : vector<128x128xf32>
    %3 = tpu.matmul %0, %2, %cst {dimension_numbers = #tpu.dot_dimension_numbers<[1], [0], [0], [1], [0, 0, 1, 1], [], []>} : vector<128x256xf32>, vector<256x128xf32>, vector<128x128xf32> -> vector<128x128xf32>
    %c0_4 = arith.constant 0 : index
    %c0_5 = arith.constant 0 : index
    %c0_6 = arith.constant 0 : index
    %4 = vector.load %arg4[%c0_4, %c0_5, %c0_6] : memref<1x1x128xf32, #tpu.memory_space<vmem>>, vector<1x1x128xf32>
    %5 = vector.shape_cast %4 : vector<1x1x128xf32> to vector<1x128xf32>
    %6 = vector.broadcast %5 : vector<1x128xf32> to vector<128x128xf32>
    %7 = arith.addf %3, %6 : vector<128x128xf32>
    %cst_7 = arith.constant 0.000000e+00 : f32
    %8 = vector.broadcast %cst_7 : f32 to vector<128x128xf32>
    %9 = arith.maximumf %7, %8 : vector<128x128xf32>
    %c0_8 = arith.constant 0 : index
    %c0_9 = arith.constant 0 : index
    %c0_10 = arith.constant 0 : index
    %10 = vector.load %arg5[%c0_8, %c0_9, %c0_10] : memref<1x128x128xf32, #tpu.memory_space<vmem>>, vector<1x128x128xf32>
    %11 = vector.shape_cast %10 : vector<1x128x128xf32> to vector<128x128xf32>
    %cst_11 = arith.constant dense<0.000000e+00> : vector<128x128xf32>
    %12 = tpu.matmul %9, %11, %cst_11 {dimension_numbers = #tpu.dot_dimension_numbers<[1], [0], [0], [1], [0, 0, 1, 1], [], []>} : vector<128x128xf32>, vector<128x128xf32>, vector<128x128xf32> -> vector<128x128xf32>
    %c0_12 = arith.constant 0 : index
    %c0_13 = arith.constant 0 : index
    %c0_14 = arith.constant 0 : index
    %13 = vector.load %arg6[%c0_12, %c0_13, %c0_14] : memref<1x1x128xf32, #tpu.memory_space<vmem>>, vector<1x1x128xf32>
    %14 = vector.shape_cast %13 : vector<1x1x128xf32> to vector<1x128xf32>
    %15 = vector.broadcast %14 : vector<1x128xf32> to vector<128x128xf32>
    %16 = arith.addf %12, %15 : vector<128x128xf32>
    %c0_15 = arith.constant 0 : index
    %c0_16 = arith.constant 0 : index
    %17 = vector.load %arg7[%c0_15, %c0_16] : memref<128x128xf32, #tpu.memory_space<vmem>>, vector<128x128xf32>
    tpu.vector_store %arg7[%c0_15, %c0_16], %16 {strides = array<i32>} : memref<128x128xf32, #tpu.memory_space<vmem>>, vector<128x128xf32>,
    return
  }
  func.func @transform_0(%arg0: i32, %arg1: memref<4xi32, #tpu.memory_space<smem>>) -> (i32, i32) {
    %c0_i32 = arith.constant 0 : i32
    %c0_i32_0 = arith.constant 0 : i32
    return %arg0, %c0_i32 : i32, i32
  }
  func.func @transform_1(%arg0: i32, %arg1: memref<4xi32, #tpu.memory_space<smem>>) -> (i32, i32, i32) {
    %0 = arith.index_cast %arg0 : i32 to index
    %1 = memref.load %arg1[%0] : memref<4xi32, #tpu.memory_space<smem>>
    %c0_i32 = arith.constant 0 : i32
    %c0_i32_0 = arith.constant 0 : i32
    %c0_i32_1 = arith.constant 0 : i32
    return %1, %c0_i32, %c0_i32_0 : i32, i32, i32
  }
  func.func @transform_2(%arg0: i32, %arg1: memref<4xi32, #tpu.memory_space<smem>>) -> (i32, i32, i32) {
    %0 = arith.index_cast %arg0 : i32 to index
    %1 = memref.load %arg1[%0] : memref<4xi32, #tpu.memory_space<smem>>
    %c0_i32 = arith.constant 0 : i32
    %c0_i32_0 = arith.constant 0 : i32
    %c0_i32_1 = arith.constant 0 : i32
    return %1, %c0_i32, %c0_i32_0 : i32, i32, i32
  }
  func.func @transform_3(%arg0: i32, %arg1: memref<4xi32, #tpu.memory_space<smem>>) -> (i32, i32, i32) {
    %0 = arith.index_cast %arg0 : i32 to index
    %1 = memref.load %arg1[%0] : memref<4xi32, #tpu.memory_space<smem>>
    %c0_i32 = arith.constant 0 : i32
    %c0_i32_0 = arith.constant 0 : i32
    %c0_i32_1 = arith.constant 0 : i32
    return %1, %c0_i32, %c0_i32_0 : i32, i32, i32
  }
  func.func @transform_4(%arg0: i32, %arg1: memref<4xi32, #tpu.memory_space<smem>>) -> (i32, i32, i32) {
    %0 = arith.index_cast %arg0 : i32 to index
    %1 = memref.load %arg1[%0] : memref<4xi32, #tpu.memory_space<smem>>
    %c0_i32 = arith.constant 0 : i32
    %c0_i32_0 = arith.constant 0 : i32
    %c0_i32_1 = arith.constant 0 : i32
    return %1, %c0_i32, %c0_i32_0 : i32, i32, i32
  }
  func.func @transform_5(%arg0: i32, %arg1: memref<4xi32, #tpu.memory_space<smem>>) -> (i32, i32) {
    %c0_i32 = arith.constant 0 : i32
    %c0_i32_0 = arith.constant 0 : i32
    return %arg0, %c0_i32 : i32, i32
  }
}

</mosaic_0001>

<llo_original>
// kernel: tpu_custom_call.1
$region0: #{tpu_custom_call.1}
  #allocation0 [shape = 'u32[]', space=smem, size = 0x4, offset = 0x4, fixed_abs, tag = 'smem constant byte address 0x4 - core index']
  #allocation1 [shape = 'u32[72,128]{1,0:T(1,128)}', space=vmem, size = 0x9000, scoped, tag = 'internal scratch']
  #allocation2 [shape = 's32[1]{0}', space=sflag, size = 0x4, scoped, tag = 'scoped memory for tpu_custom_call.1']
  #allocation3 [shape = 'u8[512]{0}', space=smem, size = 0x200, scoped, tag = 'prefetched SMEM operand 0']
  %s0 = inlined_call_operand.hbm [shape: s32[4], index: 0, kind: input, shape index: {}]
  %s1 = inlined_call_operand.hbm [shape: f32[512,256], index: 1, kind: input, shape index: {}]
  %s2 = inlined_call_operand.hbm [shape: f32[3,256,128], index: 2, kind: input, shape index: {}]
  %s3 = inlined_call_operand.hbm [shape: f32[3,1,128], index: 3, kind: input, shape index: {}]
  %s4 = inlined_call_operand.hbm [shape: f32[3,128,128], index: 4, kind: input, shape index: {}]
  %s5 = inlined_call_operand.vmem [shape: f32[3,1,128], index: 5, kind: input, shape index: {}]
  %s6 = inlined_call_operand.hbm [shape: f32[512,128], index: 6, kind: output, shape index: {}]
  %s7 = sld [smem:[#allocation0]]
  $region69: #{tpu_custom_call.1} parent=0
    _
  %s9 = ssub.s32 1, %s7
  %s10 = scalar_select 0, %s9, %s7
  %s12 = sshll.u32 %s0, 4
  %s13 = int_to_ptr.hbm [resolvable:$true] %s12
  %15 = dma.hbm_to_smem %s13, 16, [#allocation3], [#allocation2]
  %17 = dma.done [#allocation2], 16
  %18 = sfence
  $region1: #{tpu_custom_call.1} parent=0
    #allocation4 [shape = 'u8[262144]{0}', space=vmem, size = 0x40000, scoped, tag = 'input window, operand 1']
    #allocation5 [shape = 's32[2]{0}', space=sflag, size = 0x8, scoped, tag = 'scoped memory for tpu_custom_call.1']
    #allocation6 [shape = 's32[2]{0}', space=sflag, size = 0x8, scoped, tag = 'scoped memory for tpu_custom_call.1']
    #allocation7 [shape = 'u8[262144]{0}', space=vmem, size = 0x40000, scoped, tag = 'input window, operand 2']
    #allocation8 [shape = 's32[2]{0}', space=sflag, size = 0x8, scoped, tag = 'scoped memory for tpu_custom_call.1']
    #allocation9 [shape = 'u8[1024]{0}', space=vmem, size = 0x400, scoped, tag = 'input window, operand 3']
    #allocation10 [shape = 'u8[131072]{0}', space=vmem, size = 0x20000, scoped, tag = 'input window, operand 4']
    #allocation11 [shape = 's32[2]{0}', space=sflag, size = 0x8, scoped, tag = 'scoped memory for tpu_custom_call.1']
    #allocation12 [shape = 'u8[131072]{0}', space=vmem, size = 0x20000, scoped, tag = 'output window, operand 0']
    %19 = vsyncpa [#allocation5], 0
    %s20 = scalar_lea.sflag [#allocation5], 1
    %21 = vsyncpa %s20, 0
    %22 = vsyncpa [#allocation8], 0
    %s23 = scalar_lea.sflag [#allocation8], 1
    %24 = vsyncpa %s23, 0
    %25 = vsyncpa [#allocation11], 0
    %s26 = scalar_lea.sflag [#allocation11], 1
    %27 = vsyncpa %s26, 0
    %28 = vsyncpa [#allocation6], 0
    %s29 = scalar_lea.sflag [#allocation6], 1
    %30 = vsyncpa %s29, 0
    loop: start=0, step=1, limit=6
    $region2: #{tpu_custom_call.1} parent=1 // loop_pre_header
      _
    $region3: #{tpu_custom_call.1} parent=1 // loop_header
      %s32 = sphi 0, %s36
      %p33 = scmp.ge.s32.totalorder %s32, 6
      %s42 = sphi 0, %s44
      %s45 = sphi 0, %s42
      %s46 = sphi 0, %s45
      %s62 = sphi 0, %s46
      %s70 = sphi 0, %s72
      %s73 = sphi 0, %s70
      %s74 = sphi 0, %s73
      %s90 = sphi 0, %s74
      %s98 = sphi 0, %s100
      %s101 = sphi 0, %s98
      %s102 = sphi 0, %s101
      %s118 = sphi 0, %s102
      %s126 = sphi 0, %s128
      %s129 = sphi 0, %s126
      %s130 = sphi 0, %s129
      %s146 = sphi 0, %s130
      %s154 = sphi 0, %s156
      %s157 = sphi 0, %s154
      %s158 = sphi 0, %s157
      %s174 = sphi 0, %s158
      %s180 = sphi 0, %s182
      %s183 = sphi 0, %s180
      %s184 = sphi 0, %s183
      %s200 = sphi 0, %s184
    $region4: #{tpu_custom_call.1} parent=1 // loop_header_branch
      %35 = sbr.rel (%p33) target = $region8
    $region5: #{tpu_custom_call.1} parent=1 // loop_body
      %s37 = ssub.s32 %s32, 1
      %s38 = ssub.s32 %s32, 2
      %s39 = sadd.s32 %s32, 1
      %s40 = ssub.s32 %s32, %s39
      %p41 = scmp.eq.s32.totalorder %s40, 0
      %s43 = sadd.s32 %s42, 1
      %s44 = scalar_select %p41, %s42, %s43
      %p47 = pneg %p41
      %p48 = scmp.eq.s32.totalorder %s32, 3
      %p49 = por %p47, %p48
      %p50 = scmp.ne.s32.totalorder %s42, %s45
      %p51 = scmp.eq.s32.totalorder %s32, 0
      %p52 = por %p50, %p51
      %p53 = scmp.ne.s32.totalorder %s42, %s45
      %p54 = scmp.eq.s32.totalorder %s37, 3
      %p55 = por %p53, %p54
      %p56 = scmp.ne.s32.totalorder %s45, %s46
      %p57 = scmp.eq.s32.totalorder %s37, 0
      %p58 = por %p56, %p57
      %p59 = scmp.ne.s32.totalorder %s45, %s46
      %p60 = scmp.eq.s32.totalorder %s38, 3
      %p61 = por %p59, %p60
      %p63 = scmp.ne.s32.totalorder %s46, %s62
      %p64 = scmp.eq.s32.totalorder %s38, 0
      %p65 = por %p63, %p64
      %s66 = sld [smem:[#allocation3 + %s32]]
      %s67 = sld [smem:[#allocation3 + %s39]]
      %s68 = ssub.s32 %s66, %s67
      %p69 = scmp.eq.s32.totalorder %s68, 0
      %s71 = sadd.s32 %s70, 1
      %s72 = scalar_select %p69, %s70, %s71
      %p75 = pneg %p69
      %p76 = scmp.eq.s32.totalorder %s32, 3
      %p77 = por %p75, %p76
      %p78 = scmp.ne.s32.totalorder %s70, %s73
      %p79 = scmp.eq.s32.totalorder %s32, 0
      %p80 = por %p78, %p79
      %p81 = scmp.ne.s32.totalorder %s70, %s73
      %p82 = scmp.eq.s32.totalorder %s37, 3
      %p83 = por %p81, %p82
      %p84 = scmp.ne.s32.totalorder %s73, %s74
      %p85 = scmp.eq.s32.totalorder %s37, 0
      %p86 = por %p84, %p85
      %p87 = scmp.ne.s32.totalorder %s73, %s74
      %p88 = scmp.eq.s32.totalorder %s38, 3
      %p89 = por %p87, %p88
      %p91 = scmp.ne.s32.totalorder %s74, %s90
      %p92 = scmp.eq.s32.totalorder %s38, 0
      %p93 = por %p91, %p92
      %s94 = sld [smem:[#allocation3 + %s32]]
      %s95 = sld [smem:[#allocation3 + %s39]]
      %s96 = ssub.s32 %s94, %s95
      %p97 = scmp.eq.s32.totalorder %s96, 0
      %s99 = sadd.s32 %s98, 1
      %s100 = scalar_select %p97, %s98, %s99
      %p103 = pneg %p97
      %p104 = scmp.eq.s32.totalorder %s32, 3
      %p105 = por %p103, %p104
      %p106 = scmp.ne.s32.totalorder %s98, %s101
      %p107 = scmp.eq.s32.totalorder %s32, 0
      %p108 = por %p106, %p107
      %p109 = scmp.ne.s32.totalorder %s98, %s101
      %p110 = scmp.eq.s32.totalorder %s37, 3
      %p111 = por %p109, %p110
      %p112 = scmp.ne.s32.totalorder %s101, %s102
      %p113 = scmp.eq.s32.totalorder %s37, 0
      %p114 = por %p112, %p113
      %p115 = scmp.ne.s32.totalorder %s101, %s102
      %p116 = scmp.eq.s32.totalorder %s38, 3
      %p117 = por %p115, %p116
      %p119 = scmp.ne.s32.totalorder %s102, %s118
      %p120 = scmp.eq.s32.totalorder %s38, 0
      %p121 = por %p119, %p120
      %s122 = sld [smem:[#allocation3 + %s32]]
      %s123 = sld [smem:[#allocation3 + %s39]]
      %s124 = ssub.s32 %s122, %s123
      %p125 = scmp.eq.s32.totalorder %s124, 0
      %s127 = sadd.s32 %s126, 1
      %s128 = scalar_select %p125, %s126, %s127
      %p131 = pneg %p125
      %p132 = scmp.eq.s32.totalorder %s32, 3
      %p133 = por %p131, %p132
      %p134 = scmp.ne.s32.totalorder %s126, %s129
      %p135 = scmp.eq.s32.totalorder %s32, 0
      %p136 = por %p134, %p135
      %p137 = scmp.ne.s32.totalorder %s126, %s129
      %p138 = scmp.eq.s32.totalorder %s37, 3
      %p139 = por %p137, %p138
      %p140 = scmp.ne.s32.totalorder %s129, %s130
      %p141 = scmp.eq.s32.totalorder %s37, 0
      %p142 = por %p140, %p141
      %p143 = scmp.ne.s32.totalorder %s129, %s130
      %p144 = scmp.eq.s32.totalorder %s38, 3
      %p145 = por %p143, %p144
      %p147 = scmp.ne.s32.totalorder %s130, %s146
      %p148 = scmp.eq.s32.totalorder %s38, 0
      %p149 = por %p147, %p148
      %s150 = sld [smem:[#allocation3 + %s32]]
      %s151 = sld [smem:[#allocation3 + %s39]]
      %s152 = ssub.s32 %s150, %s151
      %p153 = scmp.eq.s32.totalorder %s152, 0
      %s155 = sadd.s32 %s154, 1
      %s156 = scalar_select %p153, %s154, %s155
      %p159 = pneg %p153
      %p160 = scmp.eq.s32.totalorder %s32, 3
      %p161 = por %p159, %p160
      %p162 = scmp.ne.s32.totalorder %s154, %s157
      %p163 = scmp.eq.s32.totalorder %s32, 0
      %p164 = por %p162, %p163
      %p165 = scmp.ne.s32.totalorder %s154, %s157
      %p166 = scmp.eq.s32.totalorder %s37, 3
      %p167 = por %p165, %p166
      %p168 = scmp.ne.s32.totalorder %s157, %s158
      %p169 = scmp.eq.s32.totalorder %s37, 0
      %p170 = por %p168, %p169
      %p171 = scmp.ne.s32.totalorder %s157, %s158
      %p172 = scmp.eq.s32.totalorder %s38, 3
      %p173 = por %p171, %p172
      %p175 = scmp.ne.s32.totalorder %s158, %s174
      %p176 = scmp.eq.s32.totalorder %s38, 0
      %p177 = por %p175, %p176
      %s178 = ssub.s32 %s32, %s39
      %p179 = scmp.eq.s32.totalorder %s178, 0
      %s181 = sadd.s32 %s180, 1
      %s182 = scalar_select %p179, %s180, %s181
      %p185 = pneg %p179
      %p186 = scmp.eq.s32.totalorder %s32, 3
      %p187 = por %p185, %p186
      %p188 = scmp.ne.s32.totalorder %s180, %s183
      %p189 = scmp.eq.s32.totalorder %s32, 0
      %p190 = por %p188, %p189
      %p191 = scmp.ne.s32.totalorder %s180, %s183
      %p192 = scmp.eq.s32.totalorder %s37, 3
      %p193 = por %p191, %p192
      %p194 = scmp.ne.s32.totalorder %s183, %s184
      %p195 = scmp.eq.s32.totalorder %s37, 0
      %p196 = por %p194, %p195
      %p197 = scmp.ne.s32.totalorder %s183, %s184
      %p198 = scmp.eq.s32.totalorder %s38, 3
      %p199 = por %p197, %p198
      %p201 = scmp.ne.s32.totalorder %s184, %s200
      %p202 = scmp.eq.s32.totalorder %s38, 0
      %p203 = por %p201, %p202
      %p204 = scmp.le.s32.totalorder 1, %s32
      %p205 = scmp.lt.s32.totalorder %s32, 5
      %p206 = pnand %p204, %p205
      %p207 = pneg %p206
      // Predicated region
      $region9: #{tpu_custom_call.1} parent=5 // pred_check
        _
      $region10: #{tpu_custom_call.1} parent=5 // pred_check_branch
        %209 = sbr.rel (%p206) target = $region12
      $region11: #{tpu_custom_call.1} parent=5 // pred_region
        %s210 = ssub.s32 %s32, 1
      $region12: #{tpu_custom_call.1} parent=5 // pred_fallthru
        _
      %p211 = scmp.lt.s32.totalorder %s32, 4
      // Predicated region
      $region13: #{tpu_custom_call.1} parent=5 // pred_check
        %p212 = pneg %p211
      $region14: #{tpu_custom_call.1} parent=5 // pred_check_branch
        %214 = sbr.rel (%p212) target = $region16
      $region15: #{tpu_custom_call.1} parent=5 // pred_region
        // Predicated region
        $region17: #{tpu_custom_call.1} parent=15 // pred_check
          %p215 = pneg %p52
        $region18: #{tpu_custom_call.1} parent=15 // pred_check_branch
          %217 = sbr.rel (%p215) target = $region20
        $region19: #{tpu_custom_call.1} parent=15 // pred_region
          %s218 = sand.u32 %s42, 1
          %s219 = scalar_lea.sflag [#allocation5], %s218
          %s220 = sand.u32 %s42, 1
          %s221 = smul.addr %s220, 256
          %s222 = scalar_lea.vmem [#allocation4], %s221
          %s223 = smul.u32 16, %s32
          %225 = vsyncadd %s219, 0
          %s226 = smul.addr %s223, 2
          %s227 = smul.addr %s226, 8
          %s228 = scalar_lea.hbm %s1, %s227
          %s229 = sshll.u32 %s228, 4
          %s230 = int_to_ptr.hbm [resolvable:$true] %s229
          %s231 = sshll.u32 %s222, 4
          %s232 = int_to_ptr.vmem [resolvable:$true] %s231
          %237 = dma.hbm_to_vmem [thread:$0]  %s230, 4096, %s232, %s219, 256, 256, 16
        $region20: #{tpu_custom_call.1} parent=15 // pred_fallthru
          _
        // Predicated region
        $region21: #{tpu_custom_call.1} parent=15 // pred_check
          %p238 = pneg %p80
        $region22: #{tpu_custom_call.1} parent=15 // pred_check_branch
          %240 = sbr.rel (%p238) target = $region24
        $region23: #{tpu_custom_call.1} parent=15 // pred_region
          %s241 = sand.u32 %s32, 1
          %s242 = scalar_lea.sflag [#allocation8], %s241
          %s243 = sand.u32 %s70, 1
          %s244 = smul.addr %s243, 256
          %s245 = scalar_lea.vmem [#allocation7], %s244
          %s246 = sld [smem:[#allocation3 + %s32]]
          %248 = vsyncadd %s242, 0
          %s249 = smul.addr %s246, 32
          %s250 = smul.addr %s249, 8
          %s251 = scalar_lea.hbm %s2, %s250
          %s252 = sshll.u32 %s251, 4
          %s253 = int_to_ptr.hbm [resolvable:$true] %s252
          %s254 = sshll.u32 %s245, 4
          %s255 = int_to_ptr.vmem [resolvable:$true] %s254
          %260 = dma.hbm_to_vmem [thread:$0]  %s253, 4096, %s255, %s242, 128, 128, 8
        $region24: #{tpu_custom_call.1} parent=15 // pred_fallthru
          _
        // Predicated region
        $region25: #{tpu_custom_call.1} parent=15 // pred_check
          %p261 = pneg %p108
        $region26: #{tpu_custom_call.1} parent=15 // pred_check_branch
          %263 = sbr.rel (%p261) target = $region28
        $region27: #{tpu_custom_call.1} parent=15 // pred_region
          %s264 = sand.u32 %s32, 1
          %s265 = scalar_lea.sflag [#allocation8], %s264
          %s266 = sand.u32 %s98, 1
          %s267 = scalar_lea.vmem [#allocation9], %s266
          %s268 = sld [smem:[#allocation3 + %s32]]
          %270 = vsyncadd %s265, 0
          %s271 = scalar_lea.hbm %s3, %s268
          %s273 = sshll.u32 %s271, 4
          %s274 = int_to_ptr.hbm [resolvable:$true] %s273
          %s275 = sshll.u32 %s267, 4
          %s276 = int_to_ptr.vmem [resolvable:$true] %s275
          %278 = dma.hbm_to_vmem [thread:$0]  %s274, 16, %s276, %s265
        $region28: #{tpu_custom_call.1} parent=15 // pred_fallthru
          _
        // Predicated region
        $region29: #{tpu_custom_call.1} parent=15 // pred_check
          %p279 = pneg %p136
        $region30: #{tpu_custom_call.1} parent=15 // pred_check_branch
          %281 = sbr.rel (%p279) target = $region32
        $region31: #{tpu_custom_call.1} parent=15 // pred_region
          %s282 = sand.u32 %s126, 1
          %s283 = scalar_lea.sflag [#allocation11], %s282
          %s284 = sand.u32 %s126, 1
          %s285 = smul.addr %s284, 128
          %s286 = scalar_lea.vmem [#allocation10], %s285
          %s287 = sld [smem:[#allocation3 + %s32]]
          %289 = vsyncadd %s283, 0
          %s290 = smul.addr %s287, 16
          %s291 = smul.addr %s290, 8
          %s292 = scalar_lea.hbm %s4, %s291
          %s293 = sshll.u32 %s292, 4
          %s294 = int_to_ptr.hbm [resolvable:$true] %s293
          %s295 = sshll.u32 %s286, 4
          %s296 = int_to_ptr.vmem [resolvable:$true] %s295
          %301 = dma.hbm_to_vmem [thread:$0]  %s294, 2048, %s296, %s283, 128, 128, 8
        $region32: #{tpu_custom_call.1} parent=15 // pred_fallthru
          _
        // Predicated region
        $region33: #{tpu_custom_call.1} parent=15 // pred_check
          %p302 = pneg %p164
        $region34: #{tpu_custom_call.1} parent=15 // pred_check_branch
          %304 = sbr.rel (%p302) target = $region36
        $region35: #{tpu_custom_call.1} parent=15 // pred_region
          %s305 = sld [smem:[#allocation3 + %s32]]
          %p306 = scmp.lt.s32.totalorder %s305, 2
          %s307 = scalar_select %p306, %s305, 2
          %s308 = scalar_lea.vmem %s5, %s307
          %s309 = sld [smem:[#allocation3 + %s32]]
        $region36: #{tpu_custom_call.1} parent=15 // pred_fallthru
          _
      $region16: #{tpu_custom_call.1} parent=5 // pred_fallthru
        _
      %p310 = scmp.le.s32.totalorder 1, %s32
      %p311 = scmp.lt.s32.totalorder %s32, 5
      %p312 = pnand %p310, %p311
      %p313 = pneg %p312
      // Predicated region
      $region37: #{tpu_custom_call.1} parent=5 // pred_check
        _
      $region38: #{tpu_custom_call.1} parent=5 // pred_check_branch
        %315 = sbr.rel (%p312) target = $region40
      $region39: #{tpu_custom_call.1} parent=5 // pred_region
        %s316 = ssub.s32 %s32, 1
        %s317 = sand.u32 %s45, 1
        %s318 = scalar_lea.sflag [#allocation5], %s317
        %s319 = sand.u32 %s45, 1
        %s320 = smul.addr %s319, 256
        %s321 = scalar_lea.vmem [#allocation4], %s320
        // Predicated region
        $region41: #{tpu_custom_call.1} parent=39 // pred_check
          %p322 = pneg %p58
        $region42: #{tpu_custom_call.1} parent=39 // pred_check_branch
          %324 = sbr.rel (%p322) target = $region44
        $region43: #{tpu_custom_call.1} parent=39 // pred_region
          %326 = dma.done %s318, 4096
        $region44: #{tpu_custom_call.1} parent=39 // pred_fallthru
          _
        %s327 = sand.u32 %s37, 1
        %s328 = scalar_lea.sflag [#allocation8], %s327
        %s329 = sand.u32 %s73, 1
        %s330 = smul.addr %s329, 256
        %s331 = scalar_lea.vmem [#allocation7], %s330
        // Predicated region
        $region45: #{tpu_custom_call.1} parent=39 // pred_check
          %p332 = pneg %p86
        $region46: #{tpu_custom_call.1} parent=39 // pred_check_branch
          %334 = sbr.rel (%p332) target = $region48
        $region47: #{tpu_custom_call.1} parent=39 // pred_region
          %336 = dma.done %s328, 4096
        $region48: #{tpu_custom_call.1} parent=39 // pred_fallthru
          _
        %s337 = sand.u32 %s37, 1
        %s338 = scalar_lea.sflag [#allocation8], %s337
        %s339 = sand.u32 %s101, 1
        %s340 = scalar_lea.vmem [#allocation9], %s339
        // Predicated region
        $region49: #{tpu_custom_call.1} parent=39 // pred_check
          %p341 = pneg %p114
        $region50: #{tpu_custom_call.1} parent=39 // pred_check_branch
          %343 = sbr.rel (%p341) target = $region52
        $region51: #{tpu_custom_call.1} parent=39 // pred_region
          %345 = dma.done %s338, 16
        $region52: #{tpu_custom_call.1} parent=39 // pred_fallthru
          _
        %s346 = sand.u32 %s129, 1
        %s347 = scalar_lea.sflag [#allocation11], %s346
        %s348 = sand.u32 %s129, 1
        %s349 = smul.addr %s348, 128
        %s350 = scalar_lea.vmem [#allocation10], %s349
        // Predicated region
        $region53: #{tpu_custom_call.1} parent=39 // pred_check
          %p351 = pneg %p142
        $region54: #{tpu_custom_call.1} parent=39 // pred_check_branch
          %353 = sbr.rel (%p351) target = $region56
        $region55: #{tpu_custom_call.1} parent=39 // pred_region
          %355 = dma.done %s347, 2048
        $region56: #{tpu_custom_call.1} parent=39 // pred_fallthru
          _
        %s356 = sand.u32 %s45, 1
        %s357 = scalar_lea.sflag [#allocation5], %s356
        %s358 = sand.u32 %s45, 1
        %s359 = smul.addr %s358, 256
        %s360 = scalar_lea.vmem [#allocation4], %s359
        %p361 = pneg %p58
        %p362 = pneg %p55
        %s363 = sand.u32 %s37, 1
        %s364 = scalar_lea.sflag [#allocation8], %s363
        %s365 = sand.u32 %s73, 1
        %s366 = smul.addr %s365, 256
        %s367 = scalar_lea.vmem [#allocation7], %s366
        %p368 = pneg %p86
        %p369 = pneg %p83
        %s370 = sand.u32 %s37, 1
        %s371 = scalar_lea.sflag [#allocation8], %s370
        %s372 = sand.u32 %s101, 1
        %s373 = scalar_lea.vmem [#allocation9], %s372
        %p374 = pneg %p114
        %p375 = pneg %p111
        %s376 = sand.u32 %s129, 1
        %s377 = scalar_lea.sflag [#allocation11], %s376
        %s378 = sand.u32 %s129, 1
        %s379 = smul.addr %s378, 128
        %s380 = scalar_lea.vmem [#allocation10], %s379
        %p381 = pneg %p142
        %p382 = pneg %p139
        %s383 = sld [smem:[#allocation3 + %s37]]
        %p384 = scmp.lt.s32.totalorder %s383, 2
        %s385 = scalar_select %p384, %s383, 2
        %s386 = scalar_lea.vmem %s5, %s385
        %p387 = pneg %p170
        %p388 = pneg %p167
        %p389 = pneg %p196
        %p390 = pneg %p193
        %s391 = sand.u32 %s183, 1
        %s392 = scalar_lea.sflag [#allocation6], %s391
        %s393 = sand.u32 %s183, 1
        %s394 = smul.addr %s393, 128
        %s395 = scalar_lea.vmem [#allocation12], %s394
        %s396 = smul.u32 16, %s37
        %s397 = sld [smem:[#allocation3 + %s37]]
        %s398 = sld [smem:[#allocation3 + %s37]]
        %s399 = sld [smem:[#allocation3 + %s37]]
        %s400 = sld [smem:[#allocation3 + %s37]]
        %p401 = scmp.lt.s32.totalorder %s400, 2
        %s402 = scalar_select %p401, %s400, 2
        %s403 = scalar_lea.vmem %s5, %s402
        %s404 = sld [smem:[#allocation3 + %s37]]
        %s405 = smul.u32 16, %s37
        %v406 = vld [vmem:[%s321] sm:$0xff]
        %v407 = vld [vmem:[%s321 + $0x8] sm:$0xff]
        %v408 = vld [vmem:[%s321 + $0x10] sm:$0xff]
        %v409 = vld [vmem:[%s321 + $0x18] sm:$0xff]
        %v410 = vld [vmem:[%s321 + $0x20] sm:$0xff]
        %v411 = vld [vmem:[%s321 + $0x28] sm:$0xff]
        %v412 = vld [vmem:[%s321 + $0x30] sm:$0xff]
        %v413 = vld [vmem:[%s321 + $0x38] sm:$0xff]
        %v414 = vld [vmem:[%s321 + $0x40] sm:$0xff]
        %v415 = vld [vmem:[%s321 + $0x48] sm:$0xff]
        %v416 = vld [vmem:[%s321 + $0x50] sm:$0xff]
        %v417 = vld [vmem:[%s321 + $0x58] sm:$0xff]
        %v418 = vld [vmem:[%s321 + $0x60] sm:$0xff]
        %v419 = vld [vmem:[%s321 + $0x68] sm:$0xff]
        %v420 = vld [vmem:[%s321 + $0x70] sm:$0xff]
        %v421 = vld [vmem:[%s321 + $0x78] sm:$0xff]
        %v422 = vld [vmem:[%s321 + $0x80] sm:$0xff]
        %v423 = vld [vmem:[%s321 + $0x88] sm:$0xff]
        %v424 = vld [vmem:[%s321 + $0x90] sm:$0xff]
        %v425 = vld [vmem:[%s321 + $0x98] sm:$0xff]
        %v426 = vld [vmem:[%s321 + $0xa0] sm:$0xff]
        %v427 = vld [vmem:[%s321 + $0xa8] sm:$0xff]
        %v428 = vld [vmem:[%s321 + $0xb0] sm:$0xff]
        %v429 = vld [vmem:[%s321 + $0xb8] sm:$0xff]
        %v430 = vld [vmem:[%s321 + $0xc0] sm:$0xff]
        %v431 = vld [vmem:[%s321 + $0xc8] sm:$0xff]
        %v432 = vld [vmem:[%s321 + $0xd0] sm:$0xff]
        %v433 = vld [vmem:[%s321 + $0xd8] sm:$0xff]
        %v434 = vld [vmem:[%s321 + $0xe0] sm:$0xff]
        %v435 = vld [vmem:[%s321 + $0xe8] sm:$0xff]
        %v436 = vld [vmem:[%s321 + $0xf0] sm:$0xff]
        %v437 = vld [vmem:[%s321 + $0xf8] sm:$0xff]
        %v438 = vld [vmem:[%s331] sm:$0xff]
        %v439 = vld [vmem:[%s331 + $0x8] sm:$0xff]
        %v440 = vld [vmem:[%s331 + $0x10] sm:$0xff]
        %v441 = vld [vmem:[%s331 + $0x18] sm:$0xff]
        %v442 = vld [vmem:[%s331 + $0x20] sm:$0xff]
        %v443 = vld [vmem:[%s331 + $0x28] sm:$0xff]
        %v444 = vld [vmem:[%s331 + $0x30] sm:$0xff]
        %v445 = vld [vmem:[%s331 + $0x38] sm:$0xff]
        %v446 = vld [vmem:[%s331 + $0x40] sm:$0xff]
        %v447 = vld [vmem:[%s331 + $0x48] sm:$0xff]
        %v448 = vld [vmem:[%s331 + $0x50] sm:$0xff]
        %v449 = vld [vmem:[%s331 + $0x58] sm:$0xff]
        %v450 = vld [vmem:[%s331 + $0x60] sm:$0xff]
        %v451 = vld [vmem:[%s331 + $0x68] sm:$0xff]
        %v452 = vld [vmem:[%s331 + $0x70] sm:$0xff]
        %v453 = vld [vmem:[%s331 + $0x78] sm:$0xff]
        %v454 = vld [vmem:[%s331 + $0x80] sm:$0xff]
        %v455 = vld [vmem:[%s331 + $0x88] sm:$0xff]
        %v456 = vld [vmem:[%s331 + $0x90] sm:$0xff]
        %v457 = vld [vmem:[%s331 + $0x98] sm:$0xff]
        %v458 = vld [vmem:[%s331 + $0xa0] sm:$0xff]
        %v459 = vld [vmem:[%s331 + $0xa8] sm:$0xff]
        %v460 = vld [vmem:[%s331 + $0xb0] sm:$0xff]
        %v461 = vld [vmem:[%s331 + $0xb8] sm:$0xff]
        %v462 = vld [vmem:[%s331 + $0xc0] sm:$0xff]
        %v463 = vld [vmem:[%s331 + $0xc8] sm:$0xff]
        %v464 = vld [vmem:[%s331 + $0xd0] sm:$0xff]
        %v465 = vld [vmem:[%s331 + $0xd8] sm:$0xff]
        %v466 = vld [vmem:[%s331 + $0xe0] sm:$0xff]
        %v467 = vld [vmem:[%s331 + $0xe8] sm:$0xff]
        %v468 = vld [vmem:[%s331 + $0xf0] sm:$0xff]
        %v469 = vld [vmem:[%s331 + $0xf8] sm:$0xff]
        %v470 = vld [vmem:[%s340] sm:$0x1]
        %v472 = vperm.slane %v470, 0
        %474 = vmatpush.msra.mxu0 %v453
        %475 = vmatpush.msra.mxu0 %v452
        %476 = vmatpush.msra.mxu0 %v451
        %477 = vmatpush.msra.mxu0 %v450
        %478 = vmatpush.msra.mxu0 %v449
        %479 = vmatpush.msra.mxu0 %v448
        %480 = vmatpush.msra.mxu0 %v447
        %481 = vmatpush.msra.mxu0 %v446
        %482 = vmatpush.msra.mxu0 %v445
        %483 = vmatpush.msra.mxu0 %v444
        %484 = vmatpush.msra.mxu0 %v443
        %485 = vmatpush.msra.mxu0 %v442
        %486 = vmatpush.msra.mxu0 %v441
        %487 = vmatpush.msra.mxu0 %v440
        %488 = vmatpush.msra.mxu0 %v439
        %489 = vmatpush.msra.mxu0 %v438
        %490 = vmatmul.f32.gmra.mxu0 %v406
        %v491 = vpop.f32.mrf.mxu0
        %v492 = vadd.f32 %v472, %v491
        %493 = vmatmul.f32.gmra.mxu0 %v408
        %v494 = vpop.f32.mrf.mxu0
        %v495 = vadd.f32 %v472, %v494
        %496 = vmatmul.f32.gmra.mxu0 %v410
        %v497 = vpop.f32.mrf.mxu0
        %v498 = vadd.f32 %v472, %v497
        %499 = vmatmul.f32.gmra.mxu0 %v412
        %v500 = vpop.f32.mrf.mxu0
        %v501 = vadd.f32 %v472, %v500
        %502 = vmatmul.f32.gmra.mxu0 %v414
        %v503 = vpop.f32.mrf.mxu0
        %v504 = vadd.f32 %v472, %v503
        %505 = vmatmul.f32.gmra.mxu0 %v416
        %v506 = vpop.f32.mrf.mxu0
        %v507 = vadd.f32 %v472, %v506
        %508 = vmatmul.f32.gmra.mxu0 %v418
        %v509 = vpop.f32.mrf.mxu0
        %v510 = vadd.f32 %v472, %v509
        %511 = vmatmul.f32.gmra.mxu0 %v420
        %v512 = vpop.f32.mrf.mxu0
        %v513 = vadd.f32 %v472, %v512
        %514 = vmatmul.f32.gmra.mxu0 %v422
        %v515 = vpop.f32.mrf.mxu0
        %v516 = vadd.f32 %v472, %v515
        %517 = vmatmul.f32.gmra.mxu0 %v424
        %v518 = vpop.f32.mrf.mxu0
        %v519 = vadd.f32 %v472, %v518
        %520 = vmatmul.f32.gmra.mxu0 %v426
        %v521 = vpop.f32.mrf.mxu0
        %v522 = vadd.f32 %v472, %v521
        %523 = vmatmul.f32.gmra.mxu0 %v428
        %v524 = vpop.f32.mrf.mxu0
        %v525 = vadd.f32 %v472, %v524
        %526 = vmatmul.f32.gmra.mxu0 %v430
        %v527 = vpop.f32.mrf.mxu0
        %v528 = vadd.f32 %v472, %v527
        %529 = vmatmul.f32.gmra.mxu0 %v432
        %v530 = vpop.f32.mrf.mxu0
        %v531 = vadd.f32 %v472, %v530
        %532 = vmatmul.f32.gmra.mxu0 %v434
        %v533 = vpop.f32.mrf.mxu0
        %v534 = vadd.f32 %v472, %v533
        %535 = vmatmul.f32.gmra.mxu0 %v436
        %v536 = vpop.f32.mrf.mxu0
        %v537 = vadd.f32 %v472, %v536
        %538 = vdwg.mxu0
        %539 = vmatpush.msra.mxu0 %v469
        %540 = vmatpush.msra.mxu0 %v468
        %541 = vmatpush.msra.mxu0 %v467
        %542 = vmatpush.msra.mxu0 %v466
        %543 = vmatpush.msra.mxu0 %v465
        %544 = vmatpush.msra.mxu0 %v464
        %545 = vmatpush.msra.mxu0 %v463
        %546 = vmatpush.msra.mxu0 %v462
        %547 = vmatpush.msra.mxu0 %v461
        %548 = vmatpush.msra.mxu0 %v460
        %549 = vmatpush.msra.mxu0 %v459
        %550 = vmatpush.msra.mxu0 %v458
        %551 = vmatpush.msra.mxu0 %v457
        %552 = vmatpush.msra.mxu0 %v456
        %553 = vmatpush.msra.mxu0 %v455
        %554 = vmatpush.msra.mxu0 %v454
        %555 = vmatmul.f32.gmra.mxu0 %v407
        %v556 = vpop.f32.mrf.mxu0
        %v557 = vadd.f32 %v492, %v556
        %558 = vmatmul.f32.gmra.mxu0 %v409
        %v559 = vpop.f32.mrf.mxu0
        %v560 = vadd.f32 %v495, %v559
        %561 = vmatmul.f32.gmra.mxu0 %v411
        %v562 = vpop.f32.mrf.mxu0
        %v563 = vadd.f32 %v498, %v562
        %564 = vmatmul.f32.gmra.mxu0 %v413
        %v565 = vpop.f32.mrf.mxu0
        %v566 = vadd.f32 %v501, %v565
        %567 = vmatmul.f32.gmra.mxu0 %v415
        %v568 = vpop.f32.mrf.mxu0
        %v569 = vadd.f32 %v504, %v568
        %570 = vmatmul.f32.gmra.mxu0 %v417
        %v571 = vpop.f32.mrf.mxu0
        %v572 = vadd.f32 %v507, %v571
        %573 = vmatmul.f32.gmra.mxu0 %v419
        %v574 = vpop.f32.mrf.mxu0
        %v575 = vadd.f32 %v510, %v574
        %576 = vmatmul.f32.gmra.mxu0 %v421
        %v577 = vpop.f32.mrf.mxu0
        %v578 = vadd.f32 %v513, %v577
        %579 = vmatmul.f32.gmra.mxu0 %v423
        %v580 = vpop.f32.mrf.mxu0
        %v581 = vadd.f32 %v516, %v580
        %582 = vmatmul.f32.gmra.mxu0 %v425
        %v583 = vpop.f32.mrf.mxu0
        %v584 = vadd.f32 %v519, %v583
        %585 = vmatmul.f32.gmra.mxu0 %v427
        %v586 = vpop.f32.mrf.mxu0
        %v587 = vadd.f32 %v522, %v586
        %588 = vmatmul.f32.gmra.mxu0 %v429
        %v589 = vpop.f32.mrf.mxu0
        %v590 = vadd.f32 %v525, %v589
        %591 = vmatmul.f32.gmra.mxu0 %v431
        %v592 = vpop.f32.mrf.mxu0
        %v593 = vadd.f32 %v528, %v592
        %594 = vmatmul.f32.gmra.mxu0 %v433
        %v595 = vpop.f32.mrf.mxu0
        %v596 = vadd.f32 %v531, %v595
        %597 = vmatmul.f32.gmra.mxu0 %v435
        %v598 = vpop.f32.mrf.mxu0
        %v599 = vadd.f32 %v534, %v598
        %600 = vmatmul.f32.gmra.mxu0 %v437
        %v601 = vpop.f32.mrf.mxu0
        %v602 = vadd.f32 %v537, %v601
        %603 = vdwg.mxu0
        %v604 = vmax.f32 %v557, 0.0
        %v605 = vmax.f32 %v560, 0.0
        %v606 = vmax.f32 %v563, 0.0
        %v607 = vmax.f32 %v566, 0.0
        %v608 = vmax.f32 %v569, 0.0
        %v609 = vmax.f32 %v572, 0.0
        %v610 = vmax.f32 %v575, 0.0
        %v611 = vmax.f32 %v578, 0.0
        %v612 = vmax.f32 %v581, 0.0
        %v613 = vmax.f32 %v584, 0.0
        %v614 = vmax.f32 %v587, 0.0
        %v615 = vmax.f32 %v590, 0.0
        %v616 = vmax.f32 %v593, 0.0
        %v617 = vmax.f32 %v596, 0.0
        %v618 = vmax.f32 %v599, 0.0
        %v619 = vmax.f32 %v602, 0.0
        %v620 = vld [vmem:[%s350] sm:$0xff]
        %v621 = vld [vmem:[%s350 + $0x8] sm:$0xff]
        %v622 = vld [vmem:[%s350 + $0x10] sm:$0xff]
        %v623 = vld [vmem:[%s350 + $0x18] sm:$0xff]
        %v624 = vld [vmem:[%s350 + $0x20] sm:$0xff]
        %v625 = vld [vmem:[%s350 + $0x28] sm:$0xff]
        %v626 = vld [vmem:[%s350 + $0x30] sm:$0xff]
        %v627 = vld [vmem:[%s350 + $0x38] sm:$0xff]
        %v628 = vld [vmem:[%s350 + $0x40] sm:$0xff]
        %v629 = vld [vmem:[%s350 + $0x48] sm:$0xff]
        %v630 = vld [vmem:[%s350 + $0x50] sm:$0xff]
        %v631 = vld [vmem:[%s350 + $0x58] sm:$0xff]
        %v632 = vld [vmem:[%s350 + $0x60] sm:$0xff]
        %v633 = vld [vmem:[%s350 + $0x68] sm:$0xff]
        %v634 = vld [vmem:[%s350 + $0x70] sm:$0xff]
        %v635 = vld [vmem:[%s350 + $0x78] sm:$0xff]
        %v636 = vld [vmem:[%s403] sm:$0x1]
        %v638 = vperm.slane %v636, 0
        %640 = vmatpush.msra.mxu0 %v635
        %641 = vmatpush.msra.mxu0 %v634
        %642 = vmatpush.msra.mxu0 %v633
        %643 = vmatpush.msra.mxu0 %v632
        %644 = vmatpush.msra.mxu0 %v631
        %645 = vmatpush.msra.mxu0 %v630
        %646 = vmatpush.msra.mxu0 %v629
        %647 = vmatpush.msra.mxu0 %v628
        %648 = vmatpush.msra.mxu0 %v627
        %649 = vmatpush.msra.mxu0 %v626
        %650 = vmatpush.msra.mxu0 %v625
        %651 = vmatpush.msra.mxu0 %v624
        %652 = vmatpush.msra.mxu0 %v623
        %653 = vmatpush.msra.mxu0 %v622
        %654 = vmatpush.msra.mxu0 %v621
        %655 = vmatpush.msra.mxu0 %v620
        %656 = vmatmul.f32.gmra.mxu0 %v604
        %v657 = vpop.f32.mrf.mxu0
        %v658 = vadd.f32 %v638, %v657
        %659 = vmatmul.f32.gmra.mxu0 %v605
        %v660 = vpop.f32.mrf.mxu0
        %v661 = vadd.f32 %v638, %v660
        %662 = vmatmul.f32.gmra.mxu0 %v606
        %v663 = vpop.f32.mrf.mxu0
        %v664 = vadd.f32 %v638, %v663
        %665 = vmatmul.f32.gmra.mxu0 %v607
        %v666 = vpop.f32.mrf.mxu0
        %v667 = vadd.f32 %v638, %v666
        %668 = vmatmul.f32.gmra.mxu0 %v608
        %v669 = vpop.f32.mrf.mxu0
        %v670 = vadd.f32 %v638, %v669
        %671 = vmatmul.f32.gmra.mxu0 %v609
        %v672 = vpop.f32.mrf.mxu0
        %v673 = vadd.f32 %v638, %v672
        %674 = vmatmul.f32.gmra.mxu0 %v610
        %v675 = vpop.f32.mrf.mxu0
        %v676 = vadd.f32 %v638, %v675
        %677 = vmatmul.f32.gmra.mxu0 %v611
        %v678 = vpop.f32.mrf.mxu0
        %v679 = vadd.f32 %v638, %v678
        %680 = vmatmul.f32.gmra.mxu0 %v612
        %v681 = vpop.f32.mrf.mxu0
        %v682 = vadd.f32 %v638, %v681
        %683 = vmatmul.f32.gmra.mxu0 %v613
        %v684 = vpop.f32.mrf.mxu0
        %v685 = vadd.f32 %v638, %v684
        %686 = vmatmul.f32.gmra.mxu0 %v614
        %v687 = vpop.f32.mrf.mxu0
        %v688 = vadd.f32 %v638, %v687
        %689 = vmatmul.f32.gmra.mxu0 %v615
        %v690 = vpop.f32.mrf.mxu0
        %v691 = vadd.f32 %v638, %v690
        %692 = vmatmul.f32.gmra.mxu0 %v616
        %v693 = vpop.f32.mrf.mxu0
        %v694 = vadd.f32 %v638, %v693
        %695 = vmatmul.f32.gmra.mxu0 %v617
        %v696 = vpop.f32.mrf.mxu0
        %v697 = vadd.f32 %v638, %v696
        %698 = vmatmul.f32.gmra.mxu0 %v618
        %v699 = vpop.f32.mrf.mxu0
        %v700 = vadd.f32 %v638, %v699
        %701 = vmatmul.f32.gmra.mxu0 %v619
        %v702 = vpop.f32.mrf.mxu0
        %v703 = vadd.f32 %v638, %v702
        %704 = vdwg.mxu0
        %705 = vst [vmem:[%s395] sm:$0xff] %v658
        %706 = vst [vmem:[%s395 + $0x8] sm:$0xff] %v661
        %707 = vst [vmem:[%s395 + $0x10] sm:$0xff] %v664
        %708 = vst [vmem:[%s395 + $0x18] sm:$0xff] %v667
        %709 = vst [vmem:[%s395 + $0x20] sm:$0xff] %v670
        %710 = vst [vmem:[%s395 + $0x28] sm:$0xff] %v673
        %711 = vst [vmem:[%s395 + $0x30] sm:$0xff] %v676
        %712 = vst [vmem:[%s395 + $0x38] sm:$0xff] %v679
        %713 = vst [vmem:[%s395 + $0x40] sm:$0xff] %v682
        %714 = vst [vmem:[%s395 + $0x48] sm:$0xff] %v685
        %715 = vst [vmem:[%s395 + $0x50] sm:$0xff] %v688
        %716 = vst [vmem:[%s395 + $0x58] sm:$0xff] %v691
        %717 = vst [vmem:[%s395 + $0x60] sm:$0xff] %v694
        %718 = vst [vmem:[%s395 + $0x68] sm:$0xff] %v697
        %719 = vst [vmem:[%s395 + $0x70] sm:$0xff] %v700
        %720 = vst [vmem:[%s395 + $0x78] sm:$0xff] %v703
        %s721 = sand.u32 %s183, 1
        %s722 = scalar_lea.sflag [#allocation6], %s721
        %s723 = sand.u32 %s183, 1
        %s724 = smul.addr %s723, 128
        %s725 = scalar_lea.vmem [#allocation12], %s724
        // Predicated region
        $region57: #{tpu_custom_call.1} parent=39 // pred_check
          %p726 = pneg %p193
        $region58: #{tpu_custom_call.1} parent=39 // pred_check_branch
          %728 = sbr.rel (%p726) target = $region60
        $region59: #{tpu_custom_call.1} parent=39 // pred_region
          %s729 = smul.u32 16, %s37
          %731 = vsyncadd %s722, 0
          %s732 = smul.addr %s729, 8
          %s733 = scalar_lea.hbm %s6, %s732
          %s734 = sshll.u32 %s725, 4
          %s735 = int_to_ptr.vmem [resolvable:$true] %s734
          %s736 = sshll.u32 %s733, 4
          %s737 = int_to_ptr.hbm [resolvable:$true] %s736
          %742 = dma.vmem_to_hbm [thread:$0]  %s735, 2048, %s737, %s722, 128, 128, 8
        $region60: #{tpu_custom_call.1} parent=39 // pred_fallthru
          _
      $region40: #{tpu_custom_call.1} parent=5 // pred_fallthru
        _
      %p743 = scmp.le.s32.totalorder 2, %s32
      // Predicated region
      $region61: #{tpu_custom_call.1} parent=5 // pred_check
        %p744 = pneg %p743
      $region62: #{tpu_custom_call.1} parent=5 // pred_check_branch
        %746 = sbr.rel (%p744) target = $region64
      $region63: #{tpu_custom_call.1} parent=5 // pred_region
        %s747 = ssub.s32 %s32, 2
        // Predicated region
        $region65: #{tpu_custom_call.1} parent=63 // pred_check
          %p748 = pneg %p199
        $region66: #{tpu_custom_call.1} parent=63 // pred_check_branch
          %750 = sbr.rel (%p748) target = $region68
        $region67: #{tpu_custom_call.1} parent=63 // pred_region
          %s751 = sand.u32 %s184, 1
          %s752 = scalar_lea.sflag [#allocation6], %s751
          %s753 = sand.u32 %s184, 1
          %s754 = smul.addr %s753, 128
          %s755 = scalar_lea.vmem [#allocation12], %s754
          %757 = dma.done %s752, 2048
        $region68: #{tpu_custom_call.1} parent=63 // pred_fallthru
          _
      $region64: #{tpu_custom_call.1} parent=5 // pred_fallthru
        _
    $region6: #{tpu_custom_call.1} parent=1 // loop_footer
      %s36 = sadd.s32 1, %s32
    $region7: #{tpu_custom_call.1} parent=1 // loop_footer_branch
      %31 = sbr.rel target = $region3
    $region8: #{tpu_custom_call.1} parent=1 // loop_exit
      _
    %758 = vsyncpa [#allocation5], 1
    %s759 = scalar_lea.sflag [#allocation5], 1
    %760 = vsyncpa %s759, 1
    %761 = vsyncpa [#allocation8], 1
    %s762 = scalar_lea.sflag [#allocation8], 1
    %763 = vsyncpa %s762, 1
    %764 = vsyncpa [#allocation11], 1
    %s765 = scalar_lea.sflag [#allocation11], 1
    %766 = vsyncpa %s765, 1
    %767 = vsyncpa [#allocation6], 1
    %s768 = scalar_lea.sflag [#allocation6], 1
    %769 = vsyncpa %s768, 1

</llo_original>
